<compile_context>
chip_gen: v5e
topology: v5e:2x2
jax: 0.10.0
libtpu: 0.0.40
codegen_flags: <defaults>
</compile_context>

<pallas_src>
import functools

import jax
import jax.numpy as jnp
from jax.experimental import pallas as pl
from jax.experimental.pallas import tpu as pltpu

LANES = 128            # vreg lane width (last-dim tile)
MAX_TILE_ROWS = 1024   # rows per grid step: 1024*128*4B = 512 KiB per buffer


def _cdiv(a, b):
    return (a + b - 1) // b


# ---------------------------------------------------------------- kernel ----

def _berhu_fused_kernel(p_ref, l_ref, o_ref, vacc_ref, sc_ref, *,
                        rows, tile_rows, needs_mask):
    """Fused two-phase BerHu reduction over grid = (2, num_tiles).

    phase 0: per-lane running max of |pred - label| in VMEM accumulator.
    phase 1: per-lane running BerHu sum using the threshold from phase 0
             (kept in SMEM scratch).  Cross-lane reductions run exactly once
             per phase, on the last tile.
    """
    phase = pl.program_id(0)
    tile = pl.program_id(1)
    last_tile = pl.num_programs(1) - 1

    adiff = jnp.abs(p_ref[...] - l_ref[...])
    if needs_mask:
        # Partial last tile: rows beyond `rows` hold unspecified data; zero
        # them (0 is neutral for the max and lands in the t1 branch with
        # value 0 for the sum).
        row_ids = jax.lax.broadcasted_iota(jnp.int32, (tile_rows, LANES), 0)
        valid = (tile * tile_rows + row_ids) < rows
        adiff = jnp.where(valid, adiff, jnp.float32(0.0))

    @pl.when(tile == 0)
    def _init():
        vacc_ref[...] = jnp.zeros_like(vacc_ref)

    @pl.when(phase == 0)
    def _running_max():
        vacc_ref[...] = jnp.maximum(vacc_ref[...], adiff)

    @pl.when((phase == 0) & (tile == last_tile))
    def _finalize_max():
        # Single cross-lane reduce for the whole max pass.
        c = 0.2 * jnp.max(vacc_ref[...])
        c = jnp.maximum(c, jnp.float32(1e-30))   # guard c == 0 (pred == label)
        sc_ref[0] = c
        sc_ref[1] = 0.5 / c                      # 1/(2c), computed once

    @pl.when(phase == 1)
    def _running_sum():
        c = sc_ref[0]
        inv_2c = sc_ref[1]
        # t1: adiff (adiff <= c);  t2: (adiff^2 + c^2)/(2c) = adiff^2/(2c) + c/2
        vacc_ref[...] += jnp.where(adiff <= c, adiff,
                                   adiff * adiff * inv_2c + 0.5 * c)

    @pl.when((phase == 1) & (tile == last_tile))
    def _finalize_sum():
        o_ref[0] = jnp.sum(vacc_ref[...])


# ---------------------------------------------------------------- wrapper ---

def berhu_loss_depth(pred, label, is_vector=None):
    if not is_vector:
        n, c, h, w = pred.shape
        assert c == 1
        pred = jnp.squeeze(pred)
        label = jnp.squeeze(label)
    numel = pred.size

    p_flat = jnp.ravel(pred).astype(jnp.float32)
    l_flat = jnp.ravel(label).astype(jnp.float32)

    rows = _cdiv(numel, LANES)
    lane_padded = rows * LANES
    if lane_padded != numel:
        # Rare path (numel % 128 != 0): pad with zeros, which are neutral for
        # both reductions.  The common case is a copy-free reshape.
        p_flat = jnp.pad(p_flat, (0, lane_padded - numel))
        l_flat = jnp.pad(l_flat, (0, lane_padded - numel))
    p2 = p_flat.reshape(rows, LANES)
    l2 = l_flat.reshape(rows, LANES)

    # Block selection: full-extent block when small (always legal, no OOB),
    # otherwise large 1024-row tiles with in-kernel masking of the last tile.
    tile_rows = rows if rows <= MAX_TILE_ROWS else MAX_TILE_ROWS
    num_tiles = _cdiv(rows, tile_rows)
    needs_mask = num_tiles * tile_rows != rows

    kernel = functools.partial(
        _berhu_fused_kernel,
        rows=rows, tile_rows=tile_rows, needs_mask=needs_mask)

    tile_spec = pl.BlockSpec((tile_rows, LANES), lambda phase, tile: (tile, 0))

    total = pl.pallas_call(
        kernel,
        out_shape=jax.ShapeDtypeStruct((1,), jnp.float32),
        grid=(2, num_tiles),
        in_specs=[tile_spec, tile_spec],
        out_specs=pl.BlockSpec(memory_space=pltpu.MemorySpace.SMEM),
        scratch_shapes=[
            pltpu.VMEM((tile_rows, LANES), jnp.float32),  # per-lane accumulator
            pltpu.SMEM((2,), jnp.float32),                # [c, 1/(2c)]
        ],
        compiler_params=pltpu.CompilerParams(
            dimension_semantics=("arbitrary", "arbitrary")),
    )(p2, l2)

    return total[0] / jnp.float32(numel)


# ---------------------------------------------------------------- reference -

def _berhu_ref(pred, label):
    pred = jnp.squeeze(pred).astype(jnp.float32)
    label = jnp.squeeze(label).astype(jnp.float32)
    adiff = jnp.abs(pred - label)
    bm = 0.2 * jnp.max(adiff)
    t1 = jnp.where(adiff <= bm, adiff, 0.0)
    t2 = jnp.where(adiff > bm, (adiff * adiff + bm * bm) / (2.0 * bm), 0.0)
    return (jnp.sum(t1) + jnp.sum(t2)) / pred.size


# -------------------------------------------------------------------- main --

if __name__ == "__main__":
    key = jax.random.PRNGKey(0)

    shapes = [
        (2, 1, 16, 16),    # primary small NCHW case (single tile)
        (2, 1, 272, 256),  # multi-tile path with masked partial last tile
        (1, 1, 10, 10),    # numel not a multiple of 128 (lane-pad path)
    ]
    for shape in shapes:
        key, k1, k2 = jax.random.split(key, 3)
        pred = jax.random.uniform(k1, shape, dtype=jnp.float32)
        label = jax.random.uniform(k2, shape, dtype=jnp.float32)

        loss = jax.block_until_ready(berhu_loss_depth(pred, label))
        ref = jax.block_until_ready(_berhu_ref(pred, label))
        assert jnp.allclose(loss, ref, rtol=1e-4, atol=1e-6), (shape, loss, ref)

    print("KERNEL_OK")
</pallas_src>

<mosaic_0001>
module attributes {stable_mosaic.version = 11 : i64} {
  func.func @_berhu_fused_kernel(%arg0: i32, %arg1: i32, %arg2: memref<4x128xf32, #tpu.memory_space<vmem>>, %arg3: memref<4x128xf32, #tpu.memory_space<vmem>>, %arg4: memref<1xf32, #tpu.memory_space<smem>>, %arg5: memref<4x128xf32, #tpu.memory_space<vmem>>, %arg6: memref<2xf32, #tpu.memory_space<smem>>) attributes {dimension_semantics = [#tpu.dimension_semantics<arbitrary>, #tpu.dimension_semantics<arbitrary>], iteration_bounds = array<i64: 2, 1>, scalar_prefetch = 0 : i64, scratch_operands = 2 : i64, tpu.core_type = #tpu.core_type<tc>, window_params = [{transform_indices = @transform_0, window_bounds = array<i64: 4, 128>}, {transform_indices = @transform_1, window_bounds = array<i64: 4, 128>}, {transform_indices = @transform_2, window_bounds = array<i64: 1>}]} {
    %c0 = arith.constant 0 : index
    %c0_0 = arith.constant 0 : index
    %0 = vector.load %arg2[%c0, %c0_0] : memref<4x128xf32, #tpu.memory_space<vmem>>, vector<4x128xf32>
    %c0_1 = arith.constant 0 : index
    %c0_2 = arith.constant 0 : index
    %1 = vector.load %arg3[%c0_1, %c0_2] : memref<4x128xf32, #tpu.memory_space<vmem>>, vector<4x128xf32>
    %2 = arith.subf %0, %1 : vector<4x128xf32>
    %3 = math.absf %2 : vector<4x128xf32>
    %c0_i32 = arith.constant 0 : i32
    %4 = arith.cmpi eq, %arg1, %c0_i32 : i32
    %5 = arith.extui %4 : i1 to i32
    %c0_i32_3 = arith.constant 0 : i32
    %6 = arith.cmpi ne, %5, %c0_i32_3 : i32
    scf.if %6 {
      %cst = arith.constant 0.000000e+00 : f32
      %23 = vector.broadcast %cst : f32 to vector<4x128xf32>
      %c0_13 = arith.constant 0 : index
      %c0_14 = arith.constant 0 : index
      %24 = vector.load %arg5[%c0_13, %c0_14] : memref<4x128xf32, #tpu.memory_space<vmem>>, vector<4x128xf32>
      tpu.vector_store %arg5[%c0_13, %c0_14], %23 {strides = array<i32>} : memref<4x128xf32, #tpu.memory_space<vmem>>, vector<4x128xf32>,
    } else {
    }
    %c0_i32_4 = arith.constant 0 : i32
    %7 = arith.cmpi eq, %arg0, %c0_i32_4 : i32
    %8 = arith.extui %7 : i1 to i32
    %c0_i32_5 = arith.constant 0 : i32
    %9 = arith.cmpi ne, %8, %c0_i32_5 : i32
    scf.if %9 {
      %c0_13 = arith.constant 0 : index
      %c0_14 = arith.constant 0 : index
      %23 = vector.load %arg5[%c0_13, %c0_14] : memref<4x128xf32, #tpu.memory_space<vmem>>, vector<4x128xf32>
      %24 = arith.maximumf %23, %3 : vector<4x128xf32>
      %c0_15 = arith.constant 0 : index
      %c0_16 = arith.constant 0 : index
      %25 = vector.load %arg5[%c0_15, %c0_16] : memref<4x128xf32, #tpu.memory_space<vmem>>, vector<4x128xf32>
      tpu.vector_store %arg5[%c0_15, %c0_16], %24 {strides = array<i32>} : memref<4x128xf32, #tpu.memory_space<vmem>>, vector<4x128xf32>,
    } else {
    }
    %c0_i32_6 = arith.constant 0 : i32
    %10 = arith.cmpi eq, %arg0, %c0_i32_6 : i32
    %c0_i32_7 = arith.constant 0 : i32
    %11 = arith.cmpi eq, %arg1, %c0_i32_7 : i32
    %12 = arith.andi %10, %11 : i1
    %13 = arith.extui %12 : i1 to i32
    %c0_i32_8 = arith.constant 0 : i32
    %14 = arith.cmpi ne, %13, %c0_i32_8 : i32
    scf.if %14 {
      %c0_13 = arith.constant 0 : index
      %c0_14 = arith.constant 0 : index
      %23 = vector.load %arg5[%c0_13, %c0_14] : memref<4x128xf32, #tpu.memory_space<vmem>>, vector<4x128xf32>
      %24 = vector.shape_cast %23 : vector<4x128xf32> to vector<1x4x128xf32>
      %cst = arith.constant dense<0xFF800000> : vector<1xf32>
      %25 = vector.multi_reduction <maximumf>, %24, %cst [1, 2] : vector<1x4x128xf32> to vector<1xf32>
      %26 = vector.shape_cast %25 : vector<1xf32> to vector<1x1x1xf32>
      %27 = vector.extract %26[0, 0, 0] : f32 from vector<1x1x1xf32>
      %cst_15 = arith.constant 2.000000e-01 : f32
      %28 = arith.mulf %cst_15, %27 : f32
      %cst_16 = arith.constant 1.000000e-30 : f32
      %29 = arith.maximumf %28, %cst_16 : f32
      %c0_17 = arith.constant 0 : index
      %30 = memref.load %arg6[%c0_17] : memref<2xf32, #tpu.memory_space<smem>>
      memref.store %29, %arg6[%c0_17] : memref<2xf32, #tpu.memory_space<smem>>
      %cst_18 = arith.constant 5.000000e-01 : f32
      %31 = arith.divf %cst_18, %29 : f32
      %c1 = arith.constant 1 : index
      %32 = memref.load %arg6[%c1] : memref<2xf32, #tpu.memory_space<smem>>
      memref.store %31, %arg6[%c1] : memref<2xf32, #tpu.memory_space<smem>>
    } else {
    }
    %c1_i32 = arith.constant 1 : i32
    %15 = arith.cmpi eq, %arg0, %c1_i32 : i32
    %16 = arith.extui %15 : i1 to i32
    %c0_i32_9 = arith.constant 0 : i32
    %17 = arith.cmpi ne, %16, %c0_i32_9 : i32
    scf.if %17 {
      %c0_13 = arith.constant 0 : index
      %23 = memref.load %arg6[%c0_13] : memref<2xf32, #tpu.memory_space<smem>>
      %c1 = arith.constant 1 : index
      %24 = memref.load %arg6[%c1] : memref<2xf32, #tpu.memory_space<smem>>
      %c0_14 = arith.constant 0 : index
      %c0_15 = arith.constant 0 : index
      %25 = vector.load %arg5[%c0_14, %c0_15] : memref<4x128xf32, #tpu.memory_space<vmem>>, vector<4x128xf32>
      %26 = vector.broadcast %23 : f32 to vector<4x128xf32>
      %27 = arith.cmpf ole, %3, %26 : vector<4x128xf32>
      %28 = arith.mulf %3, %3 : vector<4x128xf32>
      %29 = vector.broadcast %24 : f32 to vector<4x128xf32>
      %30 = arith.mulf %28, %29 : vector<4x128xf32>
      %cst = arith.constant 5.000000e-01 : f32
      %31 = arith.mulf %cst, %23 : f32
      %32 = vector.broadcast %31 : f32 to vector<4x128xf32>
      %33 = arith.addf %30, %32 : vector<4x128xf32>
      %34 = arith.select %27, %3, %33 : vector<4x128xi1>, vector<4x128xf32>
      %35 = arith.addf %25, %34 : vector<4x128xf32>
      %c0_16 = arith.constant 0 : index
      %c0_17 = arith.constant 0 : index
      %36 = vector.load %arg5[%c0_16, %c0_17] : memref<4x128xf32, #tpu.memory_space<vmem>>, vector<4x128xf32>
      tpu.vector_store %arg5[%c0_16, %c0_17], %35 {strides = array<i32>} : memref<4x128xf32, #tpu.memory_space<vmem>>, vector<4x128xf32>,
    } else {
    }
    %c1_i32_10 = arith.constant 1 : i32
    %18 = arith.cmpi eq, %arg0, %c1_i32_10 : i32
    %c0_i32_11 = arith.constant 0 : i32
    %19 = arith.cmpi eq, %arg1, %c0_i32_11 : i32
    %20 = arith.andi %18, %19 : i1
    %21 = arith.extui %20 : i1 to i32
    %c0_i32_12 = arith.constant 0 : i32
    %22 = arith.cmpi ne, %21, %c0_i32_12 : i32
    scf.if %22 {
      %c0_13 = arith.constant 0 : index
      %c0_14 = arith.constant 0 : index
      %23 = vector.load %arg5[%c0_13, %c0_14] : memref<4x128xf32, #tpu.memory_space<vmem>>, vector<4x128xf32>
      %24 = vector.shape_cast %23 : vector<4x128xf32> to vector<1x4x128xf32>
      %cst = arith.constant dense<0.000000e+00> : vector<1xf32>
      %25 = vector.multi_reduction <add>, %24, %cst [1, 2] : vector<1x4x128xf32> to vector<1xf32>
      %26 = vector.shape_cast %25 : vector<1xf32> to vector<1x1x1xf32>
      %27 = vector.extract %26[0, 0, 0] : f32 from vector<1x1x1xf32>
      %c0_15 = arith.constant 0 : index
      %28 = memref.load %arg4[%c0_15] : memref<1xf32, #tpu.memory_space<smem>>
      memref.store %27, %arg4[%c0_15] : memref<1xf32, #tpu.memory_space<smem>>
    } else {
    }
    return
  }
  func.func @transform_0(%arg0: i32, %arg1: i32) -> (i32, i32) {
    %c0_i32 = arith.constant 0 : i32
    %c0_i32_0 = arith.constant 0 : i32
    return %arg1, %c0_i32 : i32, i32
  }
  func.func @transform_1(%arg0: i32, %arg1: i32) -> (i32, i32) {
    %c0_i32 = arith.constant 0 : i32
    %c0_i32_0 = arith.constant 0 : i32
    return %arg1, %c0_i32 : i32, i32
  }
  func.func @transform_2(%arg0: i32, %arg1: i32) -> i32 {
    %c0_i32 = arith.constant 0 : i32
    %c0_i32_0 = arith.constant 0 : i32
    return %c0_i32 : i32
  }
}

</mosaic_0001>

<llo_original>
// kernel: tpu_custom_call.1
$region0: #{tpu_custom_call.1}
  #allocation0 [shape = 'u32[]', space=smem, size = 0x4, offset = 0x4, fixed_abs, tag = 'smem constant byte address 0x4 - core index']
  #allocation1 [shape = 'u32[72,128]{1,0:T(1,128)}', space=vmem, size = 0x9000, scoped, tag = 'internal scratch']
  #allocation2 [shape = 'f32[4,128]{1,0:T(4,128)}', space=vmem, size = 0x800, scoped, tag = 'scratch operand']
  #allocation3 [shape = 'f32[2]{0:T(128)}', space=smem, size = 0x200, scoped, tag = 'scratch operand']
  %s0 = inlined_call_operand.hbm [shape: f32[4,128], index: 0, kind: input, shape index: {}]
  %s1 = inlined_call_operand.hbm [shape: f32[4,128], index: 1, kind: input, shape index: {}]
  %s2 = inlined_call_operand.hbm [shape: f32[1], index: 2, kind: output, shape index: {}]
  %s3 = sld [smem:[#allocation0]]
  $region69: #{tpu_custom_call.1} parent=0
    _
  %s5 = ssub.s32 1, %s3
  %s6 = scalar_select 0, %s5, %s3
  $region1: #{tpu_custom_call.1} parent=0
    #allocation4 [shape = 'u8[2048]{0}', space=vmem, size = 0x800, scoped, tag = 'input window, operand 0, single buffered']
    #allocation5 [shape = 's32[2]{0}', space=sflag, size = 0x8, scoped, tag = 'scoped memory for tpu_custom_call.1']
    #allocation6 [shape = 's32[2]{0}', space=sflag, size = 0x8, scoped, tag = 'scoped memory for tpu_custom_call.1']
    #allocation7 [shape = 'u8[2048]{0}', space=vmem, size = 0x800, scoped, tag = 'input window, operand 1, single buffered']
    #allocation8 [shape = 's32[1]{0}', space=sflag, size = 0x4, scoped, tag = 'scoped memory for tpu_custom_call.1']
    #allocation9 [shape = 'u8[512]{0}', space=smem, size = 0x200, scoped, tag = 'output window, operand 0, single buffered']
    %7 = vsyncpa [#allocation5], 0
    %8 = vsyncpa [#allocation8], 0
    %9 = vsyncpa [#allocation6], 0
    loop: start=0, step=1, limit=4
    $region2: #{tpu_custom_call.1} parent=1 // loop_pre_header
      _
    $region3: #{tpu_custom_call.1} parent=1 // loop_header
      %s11 = sphi 0, %s15
      %p12 = scmp.ge.s32.totalorder %s11, 4
      %s18 = sphi 0, %s30
      %s19 = sphi 0, %s26
      %s20 = sphi 0, %s18
      %s21 = sphi 0, %s19
      %s22 = sphi 0, %s20
      %s23 = sphi 0, %s21
      %s33 = sphi 0, %s35
      %s36 = sphi 0, %s33
      %s37 = sphi 0, %s36
      %s53 = sphi 0, %s37
      %s59 = sphi 0, %s61
      %s62 = sphi 0, %s59
      %s63 = sphi 0, %s62
      %s79 = sphi 0, %s63
      %s83 = sphi 0, %s83
      %s85 = sphi 0, %s83
      %s86 = sphi 0, %s85
      %s100 = sphi 0, %s86
    $region4: #{tpu_custom_call.1} parent=1 // loop_header_branch
      %14 = sbr.rel (%p12) target = $region8
    $region5: #{tpu_custom_call.1} parent=1 // loop_body
      %s16 = ssub.s32 %s11, 1
      %s17 = ssub.s32 %s11, 2
      %s24 = sadd.s32 1, %s19
      %p25 = scmp.ge.s32.totalorder %s24, 1
      %s26 = scalar_select %p25, 0, %s24
      %s27 = sadd.s32 1, %s18
      %s28 = scalar_select %p25, %s27, %s18
      %p29 = scmp.ge.s32.totalorder %s28, 2
      %s30 = scalar_select %p29, 0, %s28
      %s31 = ssub.s32 %s19, %s26
      %p32 = scmp.eq.s32.totalorder %s31, 0
      %s34 = sadd.s32 %s33, 1
      %s35 = scalar_select %p32, %s33, %s34
      %p38 = pneg %p32
      %p39 = scmp.eq.s32.totalorder %s11, 1
      %p40 = por %p38, %p39
      %p41 = scmp.ne.s32.totalorder %s33, %s36
      %p42 = scmp.eq.s32.totalorder %s11, 0
      %p43 = por %p41, %p42
      %p44 = scmp.ne.s32.totalorder %s33, %s36
      %p45 = scmp.eq.s32.totalorder %s16, 1
      %p46 = por %p44, %p45
      %p47 = scmp.ne.s32.totalorder %s36, %s37
      %p48 = scmp.eq.s32.totalorder %s16, 0
      %p49 = por %p47, %p48
      %p50 = scmp.ne.s32.totalorder %s36, %s37
      %p51 = scmp.eq.s32.totalorder %s17, 1
      %p52 = por %p50, %p51
      %p54 = scmp.ne.s32.totalorder %s37, %s53
      %p55 = scmp.eq.s32.totalorder %s17, 0
      %p56 = por %p54, %p55
      %s57 = ssub.s32 %s19, %s26
      %p58 = scmp.eq.s32.totalorder %s57, 0
      %s60 = sadd.s32 %s59, 1
      %s61 = scalar_select %p58, %s59, %s60
      %p64 = pneg %p58
      %p65 = scmp.eq.s32.totalorder %s11, 1
      %p66 = por %p64, %p65
      %p67 = scmp.ne.s32.totalorder %s59, %s62
      %p68 = scmp.eq.s32.totalorder %s11, 0
      %p69 = por %p67, %p68
      %p70 = scmp.ne.s32.totalorder %s59, %s62
      %p71 = scmp.eq.s32.totalorder %s16, 1
      %p72 = por %p70, %p71
      %p73 = scmp.ne.s32.totalorder %s62, %s63
      %p74 = scmp.eq.s32.totalorder %s16, 0
      %p75 = por %p73, %p74
      %p76 = scmp.ne.s32.totalorder %s62, %s63
      %p77 = scmp.eq.s32.totalorder %s17, 1
      %p78 = por %p76, %p77
      %p80 = scmp.ne.s32.totalorder %s63, %s79
      %p81 = scmp.eq.s32.totalorder %s17, 0
      %p82 = por %p80, %p81
      %s84 = sadd.s32 %s83, 1
      %p87 = scmp.eq.s32.totalorder %s11, 1
      %p88 = scmp.ne.s32.totalorder %s83, %s85
      %p89 = scmp.eq.s32.totalorder %s11, 0
      %p90 = por %p88, %p89
      %p91 = scmp.ne.s32.totalorder %s83, %s85
      %p92 = scmp.eq.s32.totalorder %s16, 1
      %p93 = por %p91, %p92
      %p94 = scmp.ne.s32.totalorder %s85, %s86
      %p95 = scmp.eq.s32.totalorder %s16, 0
      %p96 = por %p94, %p95
      %p97 = scmp.ne.s32.totalorder %s85, %s86
      %p98 = scmp.eq.s32.totalorder %s17, 1
      %p99 = por %p97, %p98
      %p101 = scmp.ne.s32.totalorder %s86, %s100
      %p102 = scmp.eq.s32.totalorder %s17, 0
      %p103 = por %p101, %p102
      %p104 = scmp.le.s32.totalorder 1, %s11
      %p105 = scmp.lt.s32.totalorder %s11, 3
      %p106 = pnand %p104, %p105
      %p107 = pneg %p106
      // Predicated region
      $region9: #{tpu_custom_call.1} parent=5 // pred_check
        _
      $region10: #{tpu_custom_call.1} parent=5 // pred_check_branch
        %109 = sbr.rel (%p106) target = $region12
      $region11: #{tpu_custom_call.1} parent=5 // pred_region
        %s110 = ssub.s32 %s11, 1
        // Predicated region
        $region13: #{tpu_custom_call.1} parent=11 // pred_check
          %p111 = pneg %p49
        $region14: #{tpu_custom_call.1} parent=11 // pred_check_branch
          %113 = sbr.rel (%p111) target = $region16
        $region15: #{tpu_custom_call.1} parent=11 // pred_region
          %115 = vsyncadd [#allocation5], 0
          %s116 = smul.addr %s21, 4
          %s117 = scalar_lea.hbm %s0, %s116
          %s119 = sshll.u32 %s117, 4
          %s120 = int_to_ptr.hbm [resolvable:$true] %s119
          %s121 = sshll.u32 [#allocation4], 4
          %s122 = int_to_ptr.vmem [resolvable:$true] %s121
          %124 = dma.hbm_to_vmem [thread:$0]  %s120, 64, %s122, [#allocation5]
        $region16: #{tpu_custom_call.1} parent=11 // pred_fallthru
          _
        // Predicated region
        $region17: #{tpu_custom_call.1} parent=11 // pred_check
          %p125 = pneg %p75
        $region18: #{tpu_custom_call.1} parent=11 // pred_check_branch
          %127 = sbr.rel (%p125) target = $region20
        $region19: #{tpu_custom_call.1} parent=11 // pred_region
          %129 = vsyncadd [#allocation8], 0
          %s130 = smul.addr %s21, 4
          %s131 = scalar_lea.hbm %s1, %s130
          %s133 = sshll.u32 %s131, 4
          %s134 = int_to_ptr.hbm [resolvable:$true] %s133
          %s135 = sshll.u32 [#allocation7], 4
          %s136 = int_to_ptr.vmem [resolvable:$true] %s135
          %138 = dma.hbm_to_vmem [thread:$0]  %s134, 64, %s136, [#allocation8]
        $region20: #{tpu_custom_call.1} parent=11 // pred_fallthru
          _
      $region12: #{tpu_custom_call.1} parent=5 // pred_fallthru
        _
      %p139 = scmp.lt.s32.totalorder %s11, 2
      // Predicated region
      $region21: #{tpu_custom_call.1} parent=5 // pred_check
        %p140 = pneg %p139
      $region22: #{tpu_custom_call.1} parent=5 // pred_check_branch
        %142 = sbr.rel (%p140) target = $region24
      $region23: #{tpu_custom_call.1} parent=5 // pred_region
        _
      $region24: #{tpu_custom_call.1} parent=5 // pred_fallthru
        _
      %p143 = scmp.le.s32.totalorder 1, %s11
      %p144 = scmp.lt.s32.totalorder %s11, 3
      %p145 = pnand %p143, %p144
      %p146 = pneg %p145
      // Predicated region
      $region25: #{tpu_custom_call.1} parent=5 // pred_check
        _
      $region26: #{tpu_custom_call.1} parent=5 // pred_check_branch
        %148 = sbr.rel (%p145) target = $region28
      $region27: #{tpu_custom_call.1} parent=5 // pred_region
        %s149 = ssub.s32 %s11, 1
        // Predicated region
        $region29: #{tpu_custom_call.1} parent=27 // pred_check
          %p150 = pneg %p49
        $region30: #{tpu_custom_call.1} parent=27 // pred_check_branch
          %152 = sbr.rel (%p150) target = $region32
        $region31: #{tpu_custom_call.1} parent=27 // pred_region
          %154 = dma.done [#allocation5], 64
        $region32: #{tpu_custom_call.1} parent=27 // pred_fallthru
          _
        // Predicated region
        $region33: #{tpu_custom_call.1} parent=27 // pred_check
          %p155 = pneg %p75
        $region34: #{tpu_custom_call.1} parent=27 // pred_check_branch
          %157 = sbr.rel (%p155) target = $region36
        $region35: #{tpu_custom_call.1} parent=27 // pred_region
          %159 = dma.done [#allocation8], 64
        $region36: #{tpu_custom_call.1} parent=27 // pred_fallthru
          _
        %p160 = pneg %p49
        %p161 = pneg %p46
        %p162 = pneg %p75
        %p163 = pneg %p72
        %p164 = pneg %p96
        %p165 = pneg %p93
        %v166 = vld [vmem:[#allocation4] sm:$0xf]
        %v167 = vld [vmem:[#allocation7] sm:$0xf]
        %v168 = vsub.f32 %v166, %v167
        %v169 = vand.u32 2147483647, %v168
        %p170 = scmp.eq.s32.totalorder %s21, 0
        // Predicated region
        $region37: #{tpu_custom_call.1} parent=27 // pred_check
          %p171 = pneg %p170
        $region38: #{tpu_custom_call.1} parent=27 // pred_check_branch
          %173 = sbr.rel (%p171) target = $region40
        $region39: #{tpu_custom_call.1} parent=27 // pred_region
          %174 = vst [vmem:[#allocation2] sm:$0xf] 0.0
        $region40: #{tpu_custom_call.1} parent=27 // pred_fallthru
          _
        %p175 = scmp.eq.s32.totalorder %s20, 0
        // Predicated region
        $region41: #{tpu_custom_call.1} parent=27 // pred_check
          %p176 = pneg %p175
        $region42: #{tpu_custom_call.1} parent=27 // pred_check_branch
          %178 = sbr.rel (%p176) target = $region44
        $region43: #{tpu_custom_call.1} parent=27 // pred_region
          %v179 = vld [vmem:[#allocation2] sm:$0xf]
          %v180 = vmax.f32 %v179, %v169
          %181 = vst [vmem:[#allocation2] sm:$0xf] %v180
        $region44: #{tpu_custom_call.1} parent=27 // pred_fallthru
          _
        %p182 = pnand %p175, %p170
        %p183 = pneg %p182
        // Predicated region
        $region45: #{tpu_custom_call.1} parent=27 // pred_check
          _
        $region46: #{tpu_custom_call.1} parent=27 // pred_check_branch
          %185 = sbr.rel (%p182) target = $region48
        $region47: #{tpu_custom_call.1} parent=27 // pred_region
          %v186 = vld [vmem:[#allocation2] sm:$0xf]
          %vm187 = vcmask 1043456
          %v188 = vsel %vm187, %v186, -inf
          %189 = vmax.xlane.f32.xlu0 %v188
          %v190 = vpop.xlane.xlu0 %189
          %v191 = vrot.slane %v190, 4
          %v192 = vmax.f32 %v190, %v191
          %v193 = vrot.slane %v192, 2
          %v194 = vmax.f32 %v192, %v193
          %v195 = vrot.slane %v194, 1
          %v196 = vmax.f32 %v194, %v195
          %s197 = vtos %v196
          %s198 = smul.f32 %s197, 0.2
          %s199 = smax.f32 %s198, 1e-30
          %s200 = scalar_lea.smem [#allocation3], 0
          %201 = sst [smem:[%s200]] %s199
          %v202 = vstv %s199
          %v203 = vrcp.pop %v202
          %v204 = vmul.f32 %v202, %v203
          %v205 = vsub.f32 1.0, %v204
          %v206 = vmul.f32 %v203, %v205
          %v207 = vadd.f32 %v203, %v206
          %vm208 = vweird.f32 %v202
          %vm209 = vweird.f32 %v203
          %vm210 = vmor %vm208, %vm209
          %v211 = vsel %vm210, %v203, %v207
          %v212 = vand.u32 2147483647, %v202
          %vm213 = vcmp.eq.f32.partialorder %v212, 8.507059e+37
          %v214 = vand.u32 %v202, 2147483648
          %v215 = vor.u32 1.1754944e-38, %v214
          %v216 = vsel %vm213, %v215, %v211
          %s217 = vtos %v216
          %s218 = smul.f32 0.5, %s217
          %s219 = scalar_lea.smem [#allocation3], 1
          %220 = sst [smem:[%s219]] %s218
        $region48: #{tpu_custom_call.1} parent=27 // pred_fallthru
          _
        %p221 = scmp.eq.s32.totalorder %s20, 1
        // Predicated region
        $region49: #{tpu_custom_call.1} parent=27 // pred_check
          %p222 = pneg %p221
        $region50: #{tpu_custom_call.1} parent=27 // pred_check_branch
          %224 = sbr.rel (%p222) target = $region52
        $region51: #{tpu_custom_call.1} parent=27 // pred_region
          %s225 = sld [smem:[#allocation3]]
          %s226 = sld [smem:[#allocation3 + $0x1]]
          %v227 = vld [vmem:[#allocation2] sm:$0xf]
          %v228 = vstv %s225
          %vm229 = vcmp.le.f32.partialorder %v169, %v228
          %v230 = vmul.f32 %v169, %v169
          %v231 = vstv %s226
          %v232 = vmul.f32 %v230, %v231
          %s233 = smul.f32 %s225, 0.5
          %v234 = vstv %s233
          %v235 = vadd.f32 %v232, %v234
          %v236 = vsel %vm229, %v169, %v235
          %v237 = vadd.f32 %v227, %v236
          %238 = vst [vmem:[#allocation2] sm:$0xf] %v237
        $region52: #{tpu_custom_call.1} parent=27 // pred_fallthru
          _
        %p239 = pnand %p221, %p170
        %p240 = pneg %p239
        // Predicated region
        $region53: #{tpu_custom_call.1} parent=27 // pred_check
          _
        $region54: #{tpu_custom_call.1} parent=27 // pred_check_branch
          %242 = sbr.rel (%p239) target = $region56
        $region55: #{tpu_custom_call.1} parent=27 // pred_region
          %v243 = vld [vmem:[#allocation2] sm:$0xf]
          %vm244 = vcmask 1043456
          %v245 = vsel %vm244, %v243, 0.0
          %246 = vadd.xlane.f32.xlu0 %v245
          %v247 = vpop.xlane.xlu0 %246
          %v248 = vrot.slane %v247, 4
          %v249 = vadd.f32 %v247, %v248
          %v250 = vrot.slane %v249, 2
          %v251 = vadd.f32 %v249, %v250
          %v252 = vrot.slane %v251, 1
          %v253 = vadd.f32 %v251, %v252
          %s254 = vtos %v253
          %s255 = scalar_lea.smem [#allocation9], 0
          %256 = sst [smem:[%s255]] %s254
        $region56: #{tpu_custom_call.1} parent=27 // pred_fallthru
          _
        // Predicated region
        $region57: #{tpu_custom_call.1} parent=27 // pred_check
          %p257 = pneg %p93
        $region58: #{tpu_custom_call.1} parent=27 // pred_check_branch
          %259 = sbr.rel (%p257) target = $region60
        $region59: #{tpu_custom_call.1} parent=27 // pred_region
          %261 = vsyncadd [#allocation6], 0
          %s263 = sshll.u32 %s2, 4
          %s264 = int_to_ptr.hbm [resolvable:$true] %s263
          %266 = dma.smem_to_hbm [#allocation9], 16, %s264, [#allocation6]
        $region60: #{tpu_custom_call.1} parent=27 // pred_fallthru
          _
        // Predicated region
        $region61: #{tpu_custom_call.1} parent=27 // pred_check
          %p267 = pneg %p93
        $region62: #{tpu_custom_call.1} parent=27 // pred_check_branch
          %269 = sbr.rel (%p267) target = $region64
        $region63: #{tpu_custom_call.1} parent=27 // pred_region
          %271 = dma.done [#allocation6], 16
        $region64: #{tpu_custom_call.1} parent=27 // pred_fallthru
          _
        %272 = sfence
      $region28: #{tpu_custom_call.1} parent=5 // pred_fallthru
        _
      %p273 = scmp.le.s32.totalorder 2, %s11
      // Predicated region
      $region65: #{tpu_custom_call.1} parent=5 // pred_check
        %p274 = pneg %p273
      $region66: #{tpu_custom_call.1} parent=5 // pred_check_branch
        %276 = sbr.rel (%p274) target = $region68
      $region67: #{tpu_custom_call.1} parent=5 // pred_region
        %s277 = ssub.s32 %s11, 2
      $region68: #{tpu_custom_call.1} parent=5 // pred_fallthru
        _
    $region6: #{tpu_custom_call.1} parent=1 // loop_footer
      %s15 = sadd.s32 1, %s11
    $region7: #{tpu_custom_call.1} parent=1 // loop_footer_branch
      %10 = sbr.rel target = $region3
    $region8: #{tpu_custom_call.1} parent=1 // loop_exit
      _
    %278 = vsyncpa [#allocation5], 1
    %s279 = scalar_lea.sflag [#allocation5], 1
    %280 = vsyncpa %s279, 1
    %281 = vsyncpa [#allocation8], 1
    %282 = vsyncpa [#allocation6], 1
    %s283 = scalar_lea.sflag [#allocation6], 1
    %284 = vsyncpa %s283, 1

</llo_original>
